<compile_context>
chip_gen: v6e
topology: v6e:2x2x1
jax: 0.10.0
libtpu: 0.0.40
codegen_flags: <defaults>
</compile_context>

<pallas_src>
import functools

import jax
import jax.numpy as jnp
from jax import lax
from jax.experimental import pallas as pl
from jax.experimental.pallas import tpu as pltpu

_BN_EPS = 1e-3  # matches nn.BatchNorm2d(eps=0.001)


# ---------------------------------------------------------------------------
# Row-tile picker: divisor of H_out, flattened tile sublane-aligned (prefer
# the bf16 packing granule of 16), and >= 2 grid steps per image if possible.
# ---------------------------------------------------------------------------
def _pick_tile_h(h_out, w_out):
    # Pass 1: bf16-friendly (M % 16 == 0), >= 2 tiles, reasonably big tile.
    for d in range(h_out - 1, 0, -1):
        if h_out % d == 0 and (d * w_out) % 16 == 0 and d * w_out >= 64:
            return d
    # Pass 2: plain f32 sublane alignment (M % 8 == 0), >= 2 tiles.
    for d in range(h_out - 1, 0, -1):
        if h_out % d == 0 and (d * w_out) % 8 == 0 and d * w_out >= 64:
            return d
    return h_out                               # fallback: whole image


# ---------------------------------------------------------------------------
# Pallas kernel: in-kernel im2col + single fused-K bf16 MXU matmul
#                + folded BN + ReLU epilogue in f32
# ---------------------------------------------------------------------------
def _build_kernel(KH, KW, W_out, tile_h, cin, cout):
    T = KH * KW
    M = tile_h * W_out

    def kernel(x_ref, w_ref, scale_ref, shift_ref, o_ref):
        # x_ref    : (1, Hp, Wp, Cin)  zero-padded image (bf16), resident per n
        # w_ref    : (T*Cin, Cout)     bf16 weights, K ordered (kh, kw, cin)
        # scale_ref: (1, Cout)         f32  gamma / sqrt(var + eps)
        # shift_ref: (1, Cout)         f32  beta - mean * scale
        # o_ref    : (1, M, Cout)      f32  one row-tile of the flattened output
        row0 = pl.multiple_of(pl.program_id(1) * tile_h, tile_h)

        # Build the KH*KW shifted views from the VMEM-resident padded block.
        taps = []
        for kh in range(KH):
            rows = x_ref[0, pl.ds(row0 + kh, tile_h), :, :]     # (tile_h, Wp, Cin)
            for kw in range(KW):
                taps.append(rows[:, kw:kw + W_out, :])          # (tile_h, W_out, Cin)
        patches = taps[0] if T == 1 else jnp.concatenate(taps, axis=-1)
        patches = patches.reshape(M, T * cin)                   # bf16 already

        # Single MXU matmul with the full K = KH*KW*Cin contraction.
        acc = jnp.dot(patches, w_ref[...], preferred_element_type=jnp.float32)

        y = acc * scale_ref[...] + shift_ref[...]               # folded BN (f32)
        o_ref[0] = jnp.maximum(y, 0.0).astype(o_ref.dtype)      # ReLU

    return kernel


# ---------------------------------------------------------------------------
# Wrapper: stride-1 "conv + BN + ReLU" on NHWC via pallas_call
# ---------------------------------------------------------------------------
def conv_bn_relu_nhwc(x_nhwc, w_hwio, scale, shift, padding):
    N, H, W, Cin = x_nhwc.shape
    KH, KW, _, Cout = w_hwio.shape
    Hp, Wp = H + 2 * padding, W + 2 * padding
    H_out, W_out = Hp - KH + 1, Wp - KW + 1
    T = KH * KW
    tile_h = _pick_tile_h(H_out, W_out)
    n_tiles = H_out // tile_h
    M = tile_h * W_out

    # bf16 input in HBM: the MXU operands are bf16 anyway, so this halves the
    # input DMA traffic and the per-image resident VMEM block without any
    # change in numerics (zero padding is exact in bf16).
    xp = jnp.pad(x_nhwc.astype(jnp.bfloat16),
                 ((0, 0), (padding, padding), (padding, padding), (0, 0)))
    wk = w_hwio.reshape(T * Cin, Cout).astype(jnp.bfloat16)     # K = (kh, kw, cin)
    scale2 = scale.reshape(1, Cout).astype(jnp.float32)
    shift2 = shift.reshape(1, Cout).astype(jnp.float32)

    # VMEM budget: double-buffered input/output blocks + weights + im2col + acc.
    est = (2 * Hp * Wp * Cin * 2          # input block (x2 buffers, bf16)
           + 2 * M * Cout * 4             # output tile (x2 buffers, f32)
           + T * Cin * Cout * 2           # weights (bf16)
           + 4 * Cout * 4                 # scale / shift
           + M * T * Cin * 2              # in-kernel patches (bf16)
           + M * Cout * 4)                # f32 accumulator
    vmem_limit = int(min(max(4 * est, 32 * 1024 * 1024), 64 * 1024 * 1024))

    cost = pl.CostEstimate(
        flops=2 * N * H_out * W_out * T * Cin * Cout + 2 * N * H_out * W_out * Cout,
        transcendentals=0,
        bytes_accessed=(N * Hp * Wp * Cin * 2 + T * Cin * Cout * 2
                        + N * H_out * W_out * Cout * 4 + 4 * Cout * 4))

    kernel = _build_kernel(KH, KW, W_out, tile_h, Cin, Cout)
    out = pl.pallas_call(
        kernel,
        out_shape=jax.ShapeDtypeStruct((N, H_out * W_out, Cout), jnp.float32),
        grid=(N, n_tiles),
        in_specs=[
            # Padded image: block index constant over the row-tile axis
            # -> fetched once per image, reused for every row tile.
            pl.BlockSpec((1, Hp, Wp, Cin), lambda n, r: (n, 0, 0, 0)),
            pl.BlockSpec((T * Cin, Cout), lambda n, r: (0, 0)),
            pl.BlockSpec((1, Cout), lambda n, r: (0, 0)),
            pl.BlockSpec((1, Cout), lambda n, r: (0, 0)),
        ],
        out_specs=pl.BlockSpec((1, M, Cout), lambda n, r: (n, r, 0)),
        compiler_params=pltpu.CompilerParams(
            dimension_semantics=("parallel", "parallel"),
            vmem_limit_bytes=vmem_limit),
        cost_estimate=cost,
    )(xp, wk, scale2, shift2)
    return out.reshape(N, H_out, W_out, Cout)


# ---------------------------------------------------------------------------
# BasicConv2d module (NCHW in / NCHW out, like PyTorch)
# ---------------------------------------------------------------------------
def fold_bn(p):
    scale = p["gamma"] / jnp.sqrt(p["var"] + _BN_EPS)
    shift = p["beta"] - p["mean"] * scale
    return scale, shift


@functools.partial(jax.jit, static_argnames=("padding",))
def basic_conv2d(x_nchw, params, padding):
    x = jnp.transpose(x_nchw, (0, 2, 3, 1))        # NCHW -> NHWC
    scale, shift = fold_bn(params)
    y = conv_bn_relu_nhwc(x, params["w"], scale, shift, padding)
    return jnp.transpose(y, (0, 3, 1, 2))          # NHWC -> NCHW


def init_basic_conv(key, cin, cout, k):
    kw_, kg, kb, km, kv = jax.random.split(key, 5)
    return {
        "w": 0.1 * jax.random.normal(kw_, (k, k, cin, cout), jnp.float32),  # HWIO
        "gamma": 1.0 + 0.1 * jax.random.normal(kg, (cout,), jnp.float32),
        "beta": 0.1 * jax.random.normal(kb, (cout,), jnp.float32),
        "mean": 0.05 * jax.random.normal(km, (cout,), jnp.float32),
        "var": 0.5 + jnp.abs(jax.random.normal(kv, (cout,), jnp.float32)),
    }


# ---------------------------------------------------------------------------
# Pure-JAX reference for validation
# ---------------------------------------------------------------------------
@functools.partial(jax.jit, static_argnames=("padding",))
def basic_conv2d_ref(x_nchw, params, padding):
    x = jnp.transpose(x_nchw, (0, 2, 3, 1))
    y = lax.conv_general_dilated(
        x, params["w"], window_strides=(1, 1),
        padding=[(padding, padding), (padding, padding)],
        dimension_numbers=("NHWC", "HWIO", "NHWC"))
    scale, shift = fold_bn(params)
    y = jnp.maximum(y * scale + shift, 0.0)
    return jnp.transpose(y, (0, 3, 1, 2))


if __name__ == "__main__":
    key = jax.random.PRNGKey(0)
    kx, kp = jax.random.split(key)
    x = jax.random.normal(kx, (2, 4, 16, 16), jnp.float32)  # NCHW like PyTorch

    # (out_channels, kernel_size, padding) -- the BasicConv2d flavors used in
    # Inception-A: 3x3 pad 1, 1x1, 5x5 pad 2.
    configs = [(32, 3, 1), (64, 1, 0), (32, 5, 2)]

    for i, (cout, k, pad) in enumerate(configs):
        p = init_basic_conv(jax.random.fold_in(kp, i), x.shape[1], cout, k)
        out = jax.block_until_ready(basic_conv2d(x, p, pad))
        ref = jax.block_until_ready(basic_conv2d_ref(x, p, pad))
        assert out.shape == ref.shape == (2, cout, 16, 16), out.shape
        max_diff = float(jnp.max(jnp.abs(out - ref)))
        assert jnp.allclose(out, ref, atol=3e-2, rtol=3e-2), \
            f"config {(cout, k, pad)} max diff {max_diff}"

    print("KERNEL_OK")
</pallas_src>

<mosaic_0001>
module attributes {stable_mosaic.version = 11 : i64} {
  func.func @kernel(%arg0: i32, %arg1: i32, %arg2: memref<1x18x18x4xbf16, #tpu.memory_space<vmem>>, %arg3: memref<36x32xbf16, #tpu.memory_space<vmem>>, %arg4: memref<1x32xf32, #tpu.memory_space<vmem>>, %arg5: memref<1x32xf32, #tpu.memory_space<vmem>>, %arg6: memref<1x128x32xf32, #tpu.memory_space<vmem>>) attributes {dimension_semantics = [#tpu.dimension_semantics<parallel>, #tpu.dimension_semantics<parallel>], iteration_bounds = array<i64: 2, 2>, scalar_prefetch = 0 : i64, scratch_operands = 0 : i64, tpu.core_type = #tpu.core_type<tc>, window_params = [{transform_indices = @transform_0, window_bounds = array<i64: 1, 18, 18, 4>}, {pipeline_mode = #tpu.pipeline_mode<synchronous>, transform_indices = @transform_1, window_bounds = array<i64: 36, 32>}, {pipeline_mode = #tpu.pipeline_mode<synchronous>, transform_indices = @transform_2, window_bounds = array<i64: 1, 32>}, {pipeline_mode = #tpu.pipeline_mode<synchronous>, transform_indices = @transform_3, window_bounds = array<i64: 1, 32>}, {transform_indices = @transform_4, window_bounds = array<i64: 1, 128, 32>}]} {
    %c8_i32 = arith.constant 8 : i32
    %0 = arith.muli %arg1, %c8_i32 : i32
    %1 = tpu.assume_multiple %0, 8 : i32
    %c0_i32 = arith.constant 0 : i32
    %2 = arith.addi %1, %c0_i32 : i32
    %c0 = arith.constant 0 : index
    %3 = arith.index_cast %2 : i32 to index
    %c0_0 = arith.constant 0 : index
    %c0_1 = arith.constant 0 : index
    %4 = vector.load %arg2[%c0, %3, %c0_0, %c0_1] : memref<1x18x18x4xbf16, #tpu.memory_space<vmem>>, vector<1x8x18x4xbf16>
    %5 = vector.shape_cast %4 : vector<1x8x18x4xbf16> to vector<8x18x4xbf16>
    %6 = vector.extract_strided_slice %5 {offsets = [0, 0, 0], sizes = [8, 16, 4], strides = [1, 1, 1]} : vector<8x18x4xbf16> to vector<8x16x4xbf16>
    %7 = vector.extract_strided_slice %5 {offsets = [0, 1, 0], sizes = [8, 16, 4], strides = [1, 1, 1]} : vector<8x18x4xbf16> to vector<8x16x4xbf16>
    %8 = vector.extract_strided_slice %5 {offsets = [0, 2, 0], sizes = [8, 16, 4], strides = [1, 1, 1]} : vector<8x18x4xbf16> to vector<8x16x4xbf16>
    %c1_i32 = arith.constant 1 : i32
    %9 = arith.addi %1, %c1_i32 : i32
    %c0_2 = arith.constant 0 : index
    %10 = arith.index_cast %9 : i32 to index
    %c0_3 = arith.constant 0 : index
    %c0_4 = arith.constant 0 : index
    %11 = vector.load %arg2[%c0_2, %10, %c0_3, %c0_4] : memref<1x18x18x4xbf16, #tpu.memory_space<vmem>>, vector<1x8x18x4xbf16>
    %12 = vector.shape_cast %11 : vector<1x8x18x4xbf16> to vector<8x18x4xbf16>
    %13 = vector.extract_strided_slice %12 {offsets = [0, 0, 0], sizes = [8, 16, 4], strides = [1, 1, 1]} : vector<8x18x4xbf16> to vector<8x16x4xbf16>
    %14 = vector.extract_strided_slice %12 {offsets = [0, 1, 0], sizes = [8, 16, 4], strides = [1, 1, 1]} : vector<8x18x4xbf16> to vector<8x16x4xbf16>
    %15 = vector.extract_strided_slice %12 {offsets = [0, 2, 0], sizes = [8, 16, 4], strides = [1, 1, 1]} : vector<8x18x4xbf16> to vector<8x16x4xbf16>
    %c2_i32 = arith.constant 2 : i32
    %16 = arith.addi %1, %c2_i32 : i32
    %c0_5 = arith.constant 0 : index
    %17 = arith.index_cast %16 : i32 to index
    %c0_6 = arith.constant 0 : index
    %c0_7 = arith.constant 0 : index
    %18 = vector.load %arg2[%c0_5, %17, %c0_6, %c0_7] : memref<1x18x18x4xbf16, #tpu.memory_space<vmem>>, vector<1x8x18x4xbf16>
    %19 = vector.shape_cast %18 : vector<1x8x18x4xbf16> to vector<8x18x4xbf16>
    %20 = vector.extract_strided_slice %19 {offsets = [0, 0, 0], sizes = [8, 16, 4], strides = [1, 1, 1]} : vector<8x18x4xbf16> to vector<8x16x4xbf16>
    %21 = vector.extract_strided_slice %19 {offsets = [0, 1, 0], sizes = [8, 16, 4], strides = [1, 1, 1]} : vector<8x18x4xbf16> to vector<8x16x4xbf16>
    %22 = vector.extract_strided_slice %19 {offsets = [0, 2, 0], sizes = [8, 16, 4], strides = [1, 1, 1]} : vector<8x18x4xbf16> to vector<8x16x4xbf16>
    %23 = tpu.concatenate %6, %7, %8, %13, %14, %15, %20, %21, %22 in 2 : vector<8x16x4xbf16>, vector<8x16x4xbf16>, vector<8x16x4xbf16>, vector<8x16x4xbf16>, vector<8x16x4xbf16>, vector<8x16x4xbf16>, vector<8x16x4xbf16>, vector<8x16x4xbf16>, vector<8x16x4xbf16> -> vector<8x16x36xbf16>
    %24 = vector.shape_cast %23 : vector<8x16x36xbf16> to vector<128x36xbf16>
    %c0_8 = arith.constant 0 : index
    %c0_9 = arith.constant 0 : index
    %25 = vector.load %arg3[%c0_8, %c0_9] : memref<36x32xbf16, #tpu.memory_space<vmem>>, vector<36x32xbf16>
    %cst = arith.constant dense<0.000000e+00> : vector<128x32xf32>
    %26 = tpu.matmul %24, %25, %cst {dimension_numbers = #tpu.dot_dimension_numbers<[1], [0], [0], [1], [0, 0, 1, 1], [], []>} : vector<128x36xbf16>, vector<36x32xbf16>, vector<128x32xf32> -> vector<128x32xf32>
    %c0_10 = arith.constant 0 : index
    %c0_11 = arith.constant 0 : index
    %27 = vector.load %arg4[%c0_10, %c0_11] : memref<1x32xf32, #tpu.memory_space<vmem>>, vector<1x32xf32>
    %28 = vector.broadcast %27 : vector<1x32xf32> to vector<128x32xf32>
    %29 = arith.mulf %26, %28 : vector<128x32xf32>
    %c0_12 = arith.constant 0 : index
    %c0_13 = arith.constant 0 : index
    %30 = vector.load %arg5[%c0_12, %c0_13] : memref<1x32xf32, #tpu.memory_space<vmem>>, vector<1x32xf32>
    %31 = vector.broadcast %30 : vector<1x32xf32> to vector<128x32xf32>
    %32 = arith.addf %29, %31 : vector<128x32xf32>
    %cst_14 = arith.constant 0.000000e+00 : f32
    %33 = vector.broadcast %cst_14 : f32 to vector<128x32xf32>
    %34 = arith.maximumf %32, %33 : vector<128x32xf32>
    %c0_15 = arith.constant 0 : index
    %c0_16 = arith.constant 0 : index
    %c0_17 = arith.constant 0 : index
    %35 = vector.load %arg6[%c0_15, %c0_16, %c0_17] : memref<1x128x32xf32, #tpu.memory_space<vmem>>, vector<1x128x32xf32>
    %36 = vector.shape_cast %35 : vector<1x128x32xf32> to vector<128x32xf32>
    %37 = vector.shape_cast %34 : vector<128x32xf32> to vector<1x128x32xf32>
    tpu.vector_store %arg6[%c0_15, %c0_16, %c0_17], %37 {strides = array<i32>} : memref<1x128x32xf32, #tpu.memory_space<vmem>>, vector<1x128x32xf32>,
    return
  }
  func.func @transform_0(%arg0: i32, %arg1: i32) -> (i32, i32, i32, i32) {
    %c0_i32 = arith.constant 0 : i32
    %c0_i32_0 = arith.constant 0 : i32
    %c0_i32_1 = arith.constant 0 : i32
    %c0_i32_2 = arith.constant 0 : i32
    return %arg0, %c0_i32, %c0_i32_0, %c0_i32_1 : i32, i32, i32, i32
  }
  func.func @transform_1(%arg0: i32, %arg1: i32) -> (i32, i32) {
    %c0_i32 = arith.constant 0 : i32
    %c0_i32_0 = arith.constant 0 : i32
    %c0_i32_1 = arith.constant 0 : i32
    return %c0_i32, %c0_i32_0 : i32, i32
  }
  func.func @transform_2(%arg0: i32, %arg1: i32) -> (i32, i32) {
    %c0_i32 = arith.constant 0 : i32
    %c0_i32_0 = arith.constant 0 : i32
    %c0_i32_1 = arith.constant 0 : i32
    return %c0_i32, %c0_i32_0 : i32, i32
  }
  func.func @transform_3(%arg0: i32, %arg1: i32) -> (i32, i32) {
    %c0_i32 = arith.constant 0 : i32
    %c0_i32_0 = arith.constant 0 : i32
    %c0_i32_1 = arith.constant 0 : i32
    return %c0_i32, %c0_i32_0 : i32, i32
  }
  func.func @transform_4(%arg0: i32, %arg1: i32) -> (i32, i32, i32) {
    %c0_i32 = arith.constant 0 : i32
    %c0_i32_0 = arith.constant 0 : i32
    return %arg0, %arg1, %c0_i32 : i32, i32, i32
  }
}

</mosaic_0001>

<llo_original>
// kernel: basic_conv2d.1
$region0: #{basic_conv2d.1}
  #allocation0 [shape = 'u32[]', space=smem, size = 0x4, offset = 0x4, fixed_abs, tag = 'smem constant byte address 0x4 - core index']
  #allocation1 [shape = 'u32[144,128]{1,0:T(1,128)}', space=vmem, size = 0x12000, scoped, tag = 'internal scratch']
  %s0 = inlined_call_operand.vmem [shape: bf16[2,18,18,4], index: 0, kind: input, shape index: {}]
  %s1 = inlined_call_operand.vmem [shape: bf16[36,32], index: 1, kind: input, shape index: {}]
  %s2 = inlined_call_operand.vmem [shape: f32[1,32], index: 2, kind: input, shape index: {}]
  %s3 = inlined_call_operand.vmem [shape: f32[1,32], index: 3, kind: input, shape index: {}]
  %s4 = inlined_call_operand.hbm [shape: f32[2,256,32], index: 4, kind: output, shape index: {}]
  %s5 = sld [smem:[#allocation0]]
  $region49: #{basic_conv2d.1} parent=0
    _
  %s7 = ssub.s32 1, %s5
  %s8 = scalar_select 0, %s7, %s5
  $region1: #{basic_conv2d.1} parent=0
    #allocation2 [shape = 'u8[131072]{0}', space=vmem, size = 0x20000, scoped, tag = 'output window, operand 0']
    #allocation3 [shape = 's32[2]{0}', space=sflag, size = 0x8, scoped, tag = 'scoped memory for basic_conv2d.1']
    %9 = vsyncpa [#allocation3], 0
    %s10 = scalar_lea.sflag [#allocation3], 1
    %11 = vsyncpa %s10, 0
    loop: start=0, step=1, limit=6
    $region2: #{basic_conv2d.1} parent=1 // loop_pre_header
      _
    $region3: #{basic_conv2d.1} parent=1 // loop_header
      %s13 = sphi 0, %s17
      %p14 = scmp.ge.s32.totalorder %s13, 6
      %s20 = sphi 0, %s32
      %s21 = sphi 0, %s28
      %s22 = sphi 0, %s20
      %s23 = sphi 0, %s21
      %s24 = sphi 0, %s22
      %s25 = sphi 0, %s23
      %s35 = sphi 0, %s37
      %s38 = sphi 0, %s35
      %s39 = sphi 0, %s38
      %s55 = sphi 0, %s39
      %s59 = sphi 0, %s59
      %s61 = sphi 0, %s59
      %s62 = sphi 0, %s61
      %s76 = sphi 0, %s62
      %s80 = sphi 0, %s80
      %s82 = sphi 0, %s80
      %s83 = sphi 0, %s82
      %s97 = sphi 0, %s83
      %s101 = sphi 0, %s101
      %s103 = sphi 0, %s101
      %s104 = sphi 0, %s103
      %s118 = sphi 0, %s104
      %s126 = sphi 0, %s128
      %s129 = sphi 0, %s126
      %s130 = sphi 0, %s129
      %s146 = sphi 0, %s130
    $region4: #{basic_conv2d.1} parent=1 // loop_header_branch
      %16 = sbr.rel (%p14) target = $region8
    $region5: #{basic_conv2d.1} parent=1 // loop_body
      %s18 = ssub.s32 %s13, 1
      %s19 = ssub.s32 %s13, 2
      %s26 = sadd.s32 1, %s21
      %p27 = scmp.ge.s32.totalorder %s26, 2
      %s28 = scalar_select %p27, 0, %s26
      %s29 = sadd.s32 1, %s20
      %s30 = scalar_select %p27, %s29, %s20
      %p31 = scmp.ge.s32.totalorder %s30, 2
      %s32 = scalar_select %p31, 0, %s30
      %s33 = ssub.s32 %s20, %s32
      %p34 = scmp.eq.s32.totalorder %s33, 0
      %s36 = sadd.s32 %s35, 1
      %s37 = scalar_select %p34, %s35, %s36
      %p40 = pneg %p34
      %p41 = scmp.eq.s32.totalorder %s13, 3
      %p42 = por %p40, %p41
      %p43 = scmp.ne.s32.totalorder %s35, %s38
      %p44 = scmp.eq.s32.totalorder %s13, 0
      %p45 = por %p43, %p44
      %p46 = scmp.ne.s32.totalorder %s35, %s38
      %p47 = scmp.eq.s32.totalorder %s18, 3
      %p48 = por %p46, %p47
      %p49 = scmp.ne.s32.totalorder %s38, %s39
      %p50 = scmp.eq.s32.totalorder %s18, 0
      %p51 = por %p49, %p50
      %p52 = scmp.ne.s32.totalorder %s38, %s39
      %p53 = scmp.eq.s32.totalorder %s19, 3
      %p54 = por %p52, %p53
      %p56 = scmp.ne.s32.totalorder %s39, %s55
      %p57 = scmp.eq.s32.totalorder %s19, 0
      %p58 = por %p56, %p57
      %s60 = sadd.s32 %s59, 1
      %p63 = scmp.eq.s32.totalorder %s13, 3
      %p64 = scmp.ne.s32.totalorder %s59, %s61
      %p65 = scmp.eq.s32.totalorder %s13, 0
      %p66 = por %p64, %p65
      %p67 = scmp.ne.s32.totalorder %s59, %s61
      %p68 = scmp.eq.s32.totalorder %s18, 3
      %p69 = por %p67, %p68
      %p70 = scmp.ne.s32.totalorder %s61, %s62
      %p71 = scmp.eq.s32.totalorder %s18, 0
      %p72 = por %p70, %p71
      %p73 = scmp.ne.s32.totalorder %s61, %s62
      %p74 = scmp.eq.s32.totalorder %s19, 3
      %p75 = por %p73, %p74
      %p77 = scmp.ne.s32.totalorder %s62, %s76
      %p78 = scmp.eq.s32.totalorder %s19, 0
      %p79 = por %p77, %p78
      %s81 = sadd.s32 %s80, 1
      %p84 = scmp.eq.s32.totalorder %s13, 3
      %p85 = scmp.ne.s32.totalorder %s80, %s82
      %p86 = scmp.eq.s32.totalorder %s13, 0
      %p87 = por %p85, %p86
      %p88 = scmp.ne.s32.totalorder %s80, %s82
      %p89 = scmp.eq.s32.totalorder %s18, 3
      %p90 = por %p88, %p89
      %p91 = scmp.ne.s32.totalorder %s82, %s83
      %p92 = scmp.eq.s32.totalorder %s18, 0
      %p93 = por %p91, %p92
      %p94 = scmp.ne.s32.totalorder %s82, %s83
      %p95 = scmp.eq.s32.totalorder %s19, 3
      %p96 = por %p94, %p95
      %p98 = scmp.ne.s32.totalorder %s83, %s97
      %p99 = scmp.eq.s32.totalorder %s19, 0
      %p100 = por %p98, %p99
      %s102 = sadd.s32 %s101, 1
      %p105 = scmp.eq.s32.totalorder %s13, 3
      %p106 = scmp.ne.s32.totalorder %s101, %s103
      %p107 = scmp.eq.s32.totalorder %s13, 0
      %p108 = por %p106, %p107
      %p109 = scmp.ne.s32.totalorder %s101, %s103
      %p110 = scmp.eq.s32.totalorder %s18, 3
      %p111 = por %p109, %p110
      %p112 = scmp.ne.s32.totalorder %s103, %s104
      %p113 = scmp.eq.s32.totalorder %s18, 0
      %p114 = por %p112, %p113
      %p115 = scmp.ne.s32.totalorder %s103, %s104
      %p116 = scmp.eq.s32.totalorder %s19, 3
      %p117 = por %p115, %p116
      %p119 = scmp.ne.s32.totalorder %s104, %s118
      %p120 = scmp.eq.s32.totalorder %s19, 0
      %p121 = por %p119, %p120
      %s122 = ssub.s32 %s20, %s32
      %s123 = ssub.s32 %s21, %s28
      %s124 = sor.u32 %s122, %s123
      %p125 = scmp.eq.s32.totalorder %s124, 0
      %s127 = sadd.s32 %s126, 1
      %s128 = scalar_select %p125, %s126, %s127
      %p131 = pneg %p125
      %p132 = scmp.eq.s32.totalorder %s13, 3
      %p133 = por %p131, %p132
      %p134 = scmp.ne.s32.totalorder %s126, %s129
      %p135 = scmp.eq.s32.totalorder %s13, 0
      %p136 = por %p134, %p135
      %p137 = scmp.ne.s32.totalorder %s126, %s129
      %p138 = scmp.eq.s32.totalorder %s18, 3
      %p139 = por %p137, %p138
      %p140 = scmp.ne.s32.totalorder %s129, %s130
      %p141 = scmp.eq.s32.totalorder %s18, 0
      %p142 = por %p140, %p141
      %p143 = scmp.ne.s32.totalorder %s129, %s130
      %p144 = scmp.eq.s32.totalorder %s19, 3
      %p145 = por %p143, %p144
      %p147 = scmp.ne.s32.totalorder %s130, %s146
      %p148 = scmp.eq.s32.totalorder %s19, 0
      %p149 = por %p147, %p148
      %p150 = scmp.le.s32.totalorder 1, %s13
      %p151 = scmp.lt.s32.totalorder %s13, 5
      %p152 = pnand %p150, %p151
      %p153 = pneg %p152
      // Predicated region
      $region9: #{basic_conv2d.1} parent=5 // pred_check
        _
      $region10: #{basic_conv2d.1} parent=5 // pred_check_branch
        %155 = sbr.rel (%p152) target = $region12
      $region11: #{basic_conv2d.1} parent=5 // pred_region
        %s156 = ssub.s32 %s13, 1
        // Predicated region
        $region13: #{basic_conv2d.1} parent=11 // pred_check
          %p157 = pneg %p72
        $region14: #{basic_conv2d.1} parent=11 // pred_check_branch
          %159 = sbr.rel (%p157) target = $region16
        $region15: #{basic_conv2d.1} parent=11 // pred_region
          _
        $region16: #{basic_conv2d.1} parent=11 // pred_fallthru
          _
        // Predicated region
        $region17: #{basic_conv2d.1} parent=11 // pred_check
          %p160 = pneg %p93
        $region18: #{basic_conv2d.1} parent=11 // pred_check_branch
          %162 = sbr.rel (%p160) target = $region20
        $region19: #{basic_conv2d.1} parent=11 // pred_region
          _
        $region20: #{basic_conv2d.1} parent=11 // pred_fallthru
          _
        // Predicated region
        $region21: #{basic_conv2d.1} parent=11 // pred_check
          %p163 = pneg %p114
        $region22: #{basic_conv2d.1} parent=11 // pred_check_branch
          %165 = sbr.rel (%p163) target = $region24
        $region23: #{basic_conv2d.1} parent=11 // pred_region
          _
        $region24: #{basic_conv2d.1} parent=11 // pred_fallthru
          _
      $region12: #{basic_conv2d.1} parent=5 // pred_fallthru
        _
      %p166 = scmp.lt.s32.totalorder %s13, 4
      // Predicated region
      $region25: #{basic_conv2d.1} parent=5 // pred_check
        %p167 = pneg %p166
      $region26: #{basic_conv2d.1} parent=5 // pred_check_branch
        %169 = sbr.rel (%p167) target = $region28
      $region27: #{basic_conv2d.1} parent=5 // pred_region
        // Predicated region
        $region29: #{basic_conv2d.1} parent=27 // pred_check
          %p170 = pneg %p45
        $region30: #{basic_conv2d.1} parent=27 // pred_check_branch
          %172 = sbr.rel (%p170) target = $region32
        $region31: #{basic_conv2d.1} parent=27 // pred_region
          %p173 = scmp.lt.s32.totalorder %s20, 1
          %s174 = scalar_select %p173, %s20, 1
          %s175 = smul.addr %s174, 54
          %s176 = smul.addr %s175, 4
          %s177 = scalar_lea.vmem %s0, %s176
        $region32: #{basic_conv2d.1} parent=27 // pred_fallthru
          _
      $region28: #{basic_conv2d.1} parent=5 // pred_fallthru
        _
      %p178 = scmp.le.s32.totalorder 1, %s13
      %p179 = scmp.lt.s32.totalorder %s13, 5
      %p180 = pnand %p178, %p179
      %p181 = pneg %p180
      // Predicated region
      $region33: #{basic_conv2d.1} parent=5 // pred_check
        _
      $region34: #{basic_conv2d.1} parent=5 // pred_check_branch
        %183 = sbr.rel (%p180) target = $region36
      $region35: #{basic_conv2d.1} parent=5 // pred_region
        %s184 = ssub.s32 %s13, 1
        %p185 = scmp.lt.s32.totalorder %s22, 1
        %s186 = scalar_select %p185, %s22, 1
        %s187 = smul.addr %s186, 54
        %s188 = smul.addr %s187, 4
        %s189 = scalar_lea.vmem %s0, %s188
        %p190 = pneg %p51
        %p191 = pneg %p48
        %p192 = pneg %p72
        %p193 = pneg %p69
        %p194 = pneg %p93
        %p195 = pneg %p90
        %p196 = pneg %p114
        %p197 = pneg %p111
        %p198 = pneg %p142
        %p199 = pneg %p139
        %s200 = sand.u32 %s129, 1
        %s201 = scalar_lea.sflag [#allocation3], %s200
        %s202 = sand.u32 %s129, 1
        %s203 = smul.addr %s202, 128
        %s204 = scalar_lea.vmem [#allocation2], %s203
        %p205 = scmp.lt.s32.totalorder %s22, 1
        %s206 = scalar_select %p205, %s22, 1
        %s207 = smul.addr %s206, 54
        %s208 = smul.addr %s207, 4
        %s209 = scalar_lea.vmem %s0, %s208
        %s210 = smul.u32 16, %s23
        %s212 = smul.u32 %s23, 8
        %s213 = smul.u32 %s212, 3
        %s214 = smul.addr %s213, 4
        %s215 = scalar_lea.vmem %s209, %s214
        %v216 = vld [vmem:[%s215] sm:$0xf]
        %v217 = vld [vmem:[%s215 + $0x4] sm:$0xf]
        %v218 = vld [vmem:[%s215 + $0x8] sm:$0x1]
        %v219 = vld [vmem:[%s215 + $0xc] sm:$0xf]
        %v220 = vld [vmem:[%s215 + $0x10] sm:$0xf]
        %v221 = vld [vmem:[%s215 + $0x14] sm:$0x1]
        %v222 = vld [vmem:[%s215 + $0x18] sm:$0xf]
        %v223 = vld [vmem:[%s215 + $0x1c] sm:$0xf]
        %v224 = vld [vmem:[%s215 + $0x20] sm:$0x1]
        %v225 = vld [vmem:[%s215 + $0x24] sm:$0xf]
        %v226 = vld [vmem:[%s215 + $0x28] sm:$0xf]
        %v227 = vld [vmem:[%s215 + $0x2c] sm:$0x1]
        %v228 = vld [vmem:[%s215 + $0x30] sm:$0xf]
        %v229 = vld [vmem:[%s215 + $0x34] sm:$0xf]
        %v230 = vld [vmem:[%s215 + $0x38] sm:$0x1]
        %v231 = vld [vmem:[%s215 + $0x3c] sm:$0xf]
        %v232 = vld [vmem:[%s215 + $0x40] sm:$0xf]
        %v233 = vld [vmem:[%s215 + $0x44] sm:$0x1]
        %v234 = vld [vmem:[%s215 + $0x48] sm:$0xf]
        %v235 = vld [vmem:[%s215 + $0x4c] sm:$0xf]
        %v236 = vld [vmem:[%s215 + $0x50] sm:$0x1]
        %v237 = vld [vmem:[%s215 + $0x54] sm:$0xf]
        %v238 = vld [vmem:[%s215 + $0x58] sm:$0xf]
        %v239 = vld [vmem:[%s215 + $0x5c] sm:$0x1]
        %s240 = sadd.s32 %s212, 1
        %s241 = smul.u32 %s240, 3
        %s242 = smul.addr %s241, 4
        %s243 = scalar_lea.vmem %s209, %s242
        %v244 = vld [vmem:[%s243] sm:$0xf]
        %v245 = vld [vmem:[%s243 + $0x4] sm:$0xf]
        %v246 = vld [vmem:[%s243 + $0x8] sm:$0x1]
        %v247 = vld [vmem:[%s243 + $0xc] sm:$0xf]
        %v248 = vld [vmem:[%s243 + $0x10] sm:$0xf]
        %v249 = vld [vmem:[%s243 + $0x14] sm:$0x1]
        %v250 = vld [vmem:[%s243 + $0x18] sm:$0xf]
        %v251 = vld [vmem:[%s243 + $0x1c] sm:$0xf]
        %v252 = vld [vmem:[%s243 + $0x20] sm:$0x1]
        %v253 = vld [vmem:[%s243 + $0x24] sm:$0xf]
        %v254 = vld [vmem:[%s243 + $0x28] sm:$0xf]
        %v255 = vld [vmem:[%s243 + $0x2c] sm:$0x1]
        %v256 = vld [vmem:[%s243 + $0x30] sm:$0xf]
        %v257 = vld [vmem:[%s243 + $0x34] sm:$0xf]
        %v258 = vld [vmem:[%s243 + $0x38] sm:$0x1]
        %v259 = vld [vmem:[%s243 + $0x3c] sm:$0xf]
        %v260 = vld [vmem:[%s243 + $0x40] sm:$0xf]
        %v261 = vld [vmem:[%s243 + $0x44] sm:$0x1]
        %v262 = vld [vmem:[%s243 + $0x48] sm:$0xf]
        %v263 = vld [vmem:[%s243 + $0x4c] sm:$0xf]
        %v264 = vld [vmem:[%s243 + $0x50] sm:$0x1]
        %v265 = vld [vmem:[%s243 + $0x54] sm:$0xf]
        %v266 = vld [vmem:[%s243 + $0x58] sm:$0xf]
        %v267 = vld [vmem:[%s243 + $0x5c] sm:$0x1]
        %s268 = sadd.s32 %s212, 2
        %s269 = smul.u32 %s268, 3
        %s270 = smul.addr %s269, 4
        %s271 = scalar_lea.vmem %s209, %s270
        %v272 = vld [vmem:[%s271] sm:$0xf]
        %v273 = vld [vmem:[%s271 + $0x4] sm:$0xf]
        %v274 = vld [vmem:[%s271 + $0x8] sm:$0x1]
        %v275 = vld [vmem:[%s271 + $0xc] sm:$0xf]
        %v276 = vld [vmem:[%s271 + $0x10] sm:$0xf]
        %v277 = vld [vmem:[%s271 + $0x14] sm:$0x1]
        %v278 = vld [vmem:[%s271 + $0x18] sm:$0xf]
        %v279 = vld [vmem:[%s271 + $0x1c] sm:$0xf]
        %v280 = vld [vmem:[%s271 + $0x20] sm:$0x1]
        %v281 = vld [vmem:[%s271 + $0x24] sm:$0xf]
        %v282 = vld [vmem:[%s271 + $0x28] sm:$0xf]
        %v283 = vld [vmem:[%s271 + $0x2c] sm:$0x1]
        %v284 = vld [vmem:[%s271 + $0x30] sm:$0xf]
        %v285 = vld [vmem:[%s271 + $0x34] sm:$0xf]
        %v286 = vld [vmem:[%s271 + $0x38] sm:$0x1]
        %v287 = vld [vmem:[%s271 + $0x3c] sm:$0xf]
        %v288 = vld [vmem:[%s271 + $0x40] sm:$0xf]
        %v289 = vld [vmem:[%s271 + $0x44] sm:$0x1]
        %v290 = vld [vmem:[%s271 + $0x48] sm:$0xf]
        %v291 = vld [vmem:[%s271 + $0x4c] sm:$0xf]
        %v292 = vld [vmem:[%s271 + $0x50] sm:$0x1]
        %v293 = vld [vmem:[%s271 + $0x54] sm:$0xf]
        %v294 = vld [vmem:[%s271 + $0x58] sm:$0xf]
        %v295 = vld [vmem:[%s271 + $0x5c] sm:$0x1]
        %v312 = vunpack.c.l.b16 %v216
        %v313 = vunpack.c.l.b16 %v217
        %v314 = vunpack.c.l.b16 %v219
        %v315 = vunpack.c.l.b16 %v220
        %v316 = vunpack.c.l.b16 %v222
        %v317 = vunpack.c.l.b16 %v223
        %v318 = vunpack.c.l.b16 %v225
        %v319 = vunpack.c.l.b16 %v226
        %v320 = vunpack.c.l.b16 %v228
        %v321 = vunpack.c.l.b16 %v229
        %v322 = vunpack.c.l.b16 %v231
        %v323 = vunpack.c.l.b16 %v232
        %v324 = vunpack.c.l.b16 %v234
        %v325 = vunpack.c.l.b16 %v235
        %v326 = vunpack.c.l.b16 %v237
        %v327 = vunpack.c.l.b16 %v238
        %v328 = vpack.c.b16 %v313, %v312
        %v329 = vpack.c.b16 %v315, %v314
        %v330 = vpack.c.b16 %v317, %v316
        %v331 = vpack.c.b16 %v319, %v318
        %v332 = vpack.c.b16 %v321, %v320
        %v333 = vpack.c.b16 %v323, %v322
        %v334 = vpack.c.b16 %v325, %v324
        %v335 = vpack.c.b16 %v327, %v326
        %v344 = vunpack.c.l.b16 %v218
        %v345 = vunpack.c.l.b16 %v221
        %v346 = vunpack.c.l.b16 %v224
        %v347 = vunpack.c.l.b16 %v227
        %v348 = vunpack.c.l.b16 %v230
        %v349 = vunpack.c.l.b16 %v233
        %v350 = vunpack.c.l.b16 %v236
        %v351 = vunpack.c.l.b16 %v239
        %v352 = vpack.c.b16 %v344, %v344
        %v353 = vpack.c.b16 %v345, %v345
        %v354 = vpack.c.b16 %v346, %v346
        %v355 = vpack.c.b16 %v347, %v347
        %v356 = vpack.c.b16 %v348, %v348
        %v357 = vpack.c.b16 %v349, %v349
        %v358 = vpack.c.b16 %v350, %v350
        %v359 = vpack.c.b16 %v351, %v351
        %vm360 = vsmask.f32 7424
        %v362 = vshrl.u32 %v328, 16
        %v364 = vshll.u32 %v328, 16
        %v366 = vrot.slane %v364, 1
        %v367 = vor.u32 %v362, %v366
        %v369 = vshll.u32 %v352, 16
        %v371 = vrot.slane %v369, 1
        %v372 = vsel %vm360, %v367, %v371
        %v374 = vshrl.u32 %v329, 16
        %v376 = vshll.u32 %v329, 16
        %v378 = vrot.slane %v376, 1
        %v379 = vor.u32 %v374, %v378
        %v381 = vshll.u32 %v353, 16
        %v383 = vrot.slane %v381, 1
        %v384 = vsel %vm360, %v379, %v383
        %v386 = vshrl.u32 %v330, 16
        %v388 = vshll.u32 %v330, 16
        %v390 = vrot.slane %v388, 1
        %v391 = vor.u32 %v386, %v390
        %v393 = vshll.u32 %v354, 16
        %v395 = vrot.slane %v393, 1
        %v396 = vsel %vm360, %v391, %v395
        %v398 = vshrl.u32 %v331, 16
        %v400 = vshll.u32 %v331, 16
        %v402 = vrot.slane %v400, 1
        %v403 = vor.u32 %v398, %v402
        %v405 = vshll.u32 %v355, 16
        %v407 = vrot.slane %v405, 1
        %v408 = vsel %vm360, %v403, %v407
        %v410 = vshrl.u32 %v332, 16
        %v412 = vshll.u32 %v332, 16
        %v414 = vrot.slane %v412, 1
        %v415 = vor.u32 %v410, %v414
        %v417 = vshll.u32 %v356, 16
        %v419 = vrot.slane %v417, 1
        %v420 = vsel %vm360, %v415, %v419
        %v422 = vshrl.u32 %v333, 16
        %v424 = vshll.u32 %v333, 16
        %v426 = vrot.slane %v424, 1
        %v427 = vor.u32 %v422, %v426
        %v429 = vshll.u32 %v357, 16
        %v431 = vrot.slane %v429, 1
        %v432 = vsel %vm360, %v427, %v431
        %v434 = vshrl.u32 %v334, 16
        %v436 = vshll.u32 %v334, 16
        %v438 = vrot.slane %v436, 1
        %v439 = vor.u32 %v434, %v438
        %v441 = vshll.u32 %v358, 16
        %v443 = vrot.slane %v441, 1
        %v444 = vsel %vm360, %v439, %v443
        %v446 = vshrl.u32 %v335, 16
        %v448 = vshll.u32 %v335, 16
        %v450 = vrot.slane %v448, 1
        %v451 = vor.u32 %v446, %v450
        %v453 = vshll.u32 %v359, 16
        %v455 = vrot.slane %v453, 1
        %v456 = vsel %vm360, %v451, %v455
        %457 = vrot.lane.b32.xlu0 %v372, 4
        %v458 = vpop.permute.xlu0 %457
        %459 = vrot.lane.b32.xlu0 %v384, 4
        %v460 = vpop.permute.xlu0 %459
        %461 = vrot.lane.b32.xlu0 %v396, 4
        %v462 = vpop.permute.xlu0 %461
        %463 = vrot.lane.b32.xlu0 %v408, 4
        %v464 = vpop.permute.xlu0 %463
        %465 = vrot.lane.b32.xlu0 %v420, 4
        %v466 = vpop.permute.xlu0 %465
        %467 = vrot.lane.b32.xlu0 %v432, 4
        %v468 = vpop.permute.xlu0 %467
        %469 = vrot.lane.b32.xlu0 %v444, 4
        %v470 = vpop.permute.xlu0 %469
        %471 = vrot.lane.b32.xlu0 %v456, 4
        %v472 = vpop.permute.xlu0 %471
        %vm473 = vcmask 1046528
        %v474 = vrot.slane %v328, 1
        %v475 = vrot.slane %v352, 1
        %v476 = vsel %vm473, %v474, %v475
        %v477 = vrot.slane %v329, 1
        %v478 = vrot.slane %v353, 1
        %v479 = vsel %vm473, %v477, %v478
        %v480 = vrot.slane %v330, 1
        %v481 = vrot.slane %v354, 1
        %v482 = vsel %vm473, %v480, %v481
        %v483 = vrot.slane %v331, 1
        %v484 = vrot.slane %v355, 1
        %v485 = vsel %vm473, %v483, %v484
        %v486 = vrot.slane %v332, 1
        %v487 = vrot.slane %v356, 1
        %v488 = vsel %vm473, %v486, %v487
        %v489 = vrot.slane %v333, 1
        %v490 = vrot.slane %v357, 1
        %v491 = vsel %vm473, %v489, %v490
        %v492 = vrot.slane %v334, 1
        %v493 = vrot.slane %v358, 1
        %v494 = vsel %vm473, %v492, %v493
        %v495 = vrot.slane %v335, 1
        %v496 = vrot.slane %v359, 1
        %v497 = vsel %vm473, %v495, %v496
        %498 = vrot.lane.b32.xlu0 %v476, 8
        %v499 = vpop.permute.xlu0 %498
        %500 = vrot.lane.b32.xlu0 %v479, 8
        %v501 = vpop.permute.xlu0 %500
        %502 = vrot.lane.b32.xlu0 %v482, 8
        %v503 = vpop.permute.xlu0 %502
        %504 = vrot.lane.b32.xlu0 %v485, 8
        %v505 = vpop.permute.xlu0 %504
        %506 = vrot.lane.b32.xlu0 %v488, 8
        %v507 = vpop.permute.xlu0 %506
        %508 = vrot.lane.b32.xlu0 %v491, 8
        %v509 = vpop.permute.xlu0 %508
        %510 = vrot.lane.b32.xlu0 %v494, 8
        %v511 = vpop.permute.xlu0 %510
        %512 = vrot.lane.b32.xlu0 %v497, 8
        %v513 = vpop.permute.xlu0 %512
        %v530 = vunpack.c.l.b16 %v244
        %v531 = vunpack.c.l.b16 %v245
        %v532 = vunpack.c.l.b16 %v247
        %v533 = vunpack.c.l.b16 %v248
        %v534 = vunpack.c.l.b16 %v250
        %v535 = vunpack.c.l.b16 %v251
        %v536 = vunpack.c.l.b16 %v253
        %v537 = vunpack.c.l.b16 %v254
        %v538 = vunpack.c.l.b16 %v256
        %v539 = vunpack.c.l.b16 %v257
        %v540 = vunpack.c.l.b16 %v259
        %v541 = vunpack.c.l.b16 %v260
        %v542 = vunpack.c.l.b16 %v262
        %v543 = vunpack.c.l.b16 %v263
        %v544 = vunpack.c.l.b16 %v265
        %v545 = vunpack.c.l.b16 %v266
        %v546 = vpack.c.b16 %v531, %v530
        %v547 = vpack.c.b16 %v533, %v532
        %v548 = vpack.c.b16 %v535, %v534
        %v549 = vpack.c.b16 %v537, %v536
        %v550 = vpack.c.b16 %v539, %v538
        %v551 = vpack.c.b16 %v541, %v540
        %v552 = vpack.c.b16 %v543, %v542
        %v553 = vpack.c.b16 %v545, %v544
        %554 = vrot.lane.b32.xlu0 %v546, 12
        %v555 = vpop.permute.xlu0 %554
        %556 = vrot.lane.b32.xlu0 %v547, 12
        %v557 = vpop.permute.xlu0 %556
        %558 = vrot.lane.b32.xlu0 %v548, 12
        %v559 = vpop.permute.xlu0 %558
        %560 = vrot.lane.b32.xlu0 %v549, 12
        %v561 = vpop.permute.xlu0 %560
        %562 = vrot.lane.b32.xlu0 %v550, 12
        %v563 = vpop.permute.xlu0 %562
        %564 = vrot.lane.b32.xlu0 %v551, 12
        %v565 = vpop.permute.xlu0 %564
        %566 = vrot.lane.b32.xlu0 %v552, 12
        %v567 = vpop.permute.xlu0 %566
        %568 = vrot.lane.b32.xlu0 %v553, 12
        %v569 = vpop.permute.xlu0 %568
        %v578 = vunpack.c.l.b16 %v246
        %v579 = vunpack.c.l.b16 %v249
        %v580 = vunpack.c.l.b16 %v252
        %v581 = vunpack.c.l.b16 %v255
        %v582 = vunpack.c.l.b16 %v258
        %v583 = vunpack.c.l.b16 %v261
        %v584 = vunpack.c.l.b16 %v264
        %v585 = vunpack.c.l.b16 %v267
        %v586 = vpack.c.b16 %v578, %v578
        %v587 = vpack.c.b16 %v579, %v579
        %v588 = vpack.c.b16 %v580, %v580
        %v589 = vpack.c.b16 %v581, %v581
        %v590 = vpack.c.b16 %v582, %v582
        %v591 = vpack.c.b16 %v583, %v583
        %v592 = vpack.c.b16 %v584, %v584
        %v593 = vpack.c.b16 %v585, %v585
        %v595 = vshrl.u32 %v546, 16
        %v597 = vshll.u32 %v546, 16
        %v599 = vrot.slane %v597, 1
        %v600 = vor.u32 %v595, %v599
        %v602 = vshll.u32 %v586, 16
        %v604 = vrot.slane %v602, 1
        %v605 = vsel %vm360, %v600, %v604
        %v607 = vshrl.u32 %v547, 16
        %v609 = vshll.u32 %v547, 16
        %v611 = vrot.slane %v609, 1
        %v612 = vor.u32 %v607, %v611
        %v614 = vshll.u32 %v587, 16
        %v616 = vrot.slane %v614, 1
        %v617 = vsel %vm360, %v612, %v616
        %v619 = vshrl.u32 %v548, 16
        %v621 = vshll.u32 %v548, 16
        %v623 = vrot.slane %v621, 1
        %v624 = vor.u32 %v619, %v623
        %v626 = vshll.u32 %v588, 16
        %v628 = vrot.slane %v626, 1
        %v629 = vsel %vm360, %v624, %v628
        %v631 = vshrl.u32 %v549, 16
        %v633 = vshll.u32 %v549, 16
        %v635 = vrot.slane %v633, 1
        %v636 = vor.u32 %v631, %v635
        %v638 = vshll.u32 %v589, 16
        %v640 = vrot.slane %v638, 1
        %v641 = vsel %vm360, %v636, %v640
        %v643 = vshrl.u32 %v550, 16
        %v645 = vshll.u32 %v550, 16
        %v647 = vrot.slane %v645, 1
        %v648 = vor.u32 %v643, %v647
        %v650 = vshll.u32 %v590, 16
        %v652 = vrot.slane %v650, 1
        %v653 = vsel %vm360, %v648, %v652
        %v655 = vshrl.u32 %v551, 16
        %v657 = vshll.u32 %v551, 16
        %v659 = vrot.slane %v657, 1
        %v660 = vor.u32 %v655, %v659
        %v662 = vshll.u32 %v591, 16
        %v664 = vrot.slane %v662, 1
        %v665 = vsel %vm360, %v660, %v664
        %v667 = vshrl.u32 %v552, 16
        %v669 = vshll.u32 %v552, 16
        %v671 = vrot.slane %v669, 1
        %v672 = vor.u32 %v667, %v671
        %v674 = vshll.u32 %v592, 16
        %v676 = vrot.slane %v674, 1
        %v677 = vsel %vm360, %v672, %v676
        %v679 = vshrl.u32 %v553, 16
        %v681 = vshll.u32 %v553, 16
        %v683 = vrot.slane %v681, 1
        %v684 = vor.u32 %v679, %v683
        %v686 = vshll.u32 %v593, 16
        %v688 = vrot.slane %v686, 1
        %v689 = vsel %vm360, %v684, %v688
        %690 = vrot.lane.b32.xlu0 %v605, 16
        %v691 = vpop.permute.xlu0 %690
        %692 = vrot.lane.b32.xlu0 %v617, 16
        %v693 = vpop.permute.xlu0 %692
        %694 = vrot.lane.b32.xlu0 %v629, 16
        %v695 = vpop.permute.xlu0 %694
        %696 = vrot.lane.b32.xlu0 %v641, 16
        %v697 = vpop.permute.xlu0 %696
        %698 = vrot.lane.b32.xlu0 %v653, 16
        %v699 = vpop.permute.xlu0 %698
        %700 = vrot.lane.b32.xlu0 %v665, 16
        %v701 = vpop.permute.xlu0 %700
        %702 = vrot.lane.b32.xlu0 %v677, 16
        %v703 = vpop.permute.xlu0 %702
        %704 = vrot.lane.b32.xlu0 %v689, 16
        %v705 = vpop.permute.xlu0 %704
        %v706 = vrot.slane %v546, 1
        %v707 = vrot.slane %v586, 1
        %v708 = vsel %vm473, %v706, %v707
        %v709 = vrot.slane %v547, 1
        %v710 = vrot.slane %v587, 1
        %v711 = vsel %vm473, %v709, %v710
        %v712 = vrot.slane %v548, 1
        %v713 = vrot.slane %v588, 1
        %v714 = vsel %vm473, %v712, %v713
        %v715 = vrot.slane %v549, 1
        %v716 = vrot.slane %v589, 1
        %v717 = vsel %vm473, %v715, %v716
        %v718 = vrot.slane %v550, 1
        %v719 = vrot.slane %v590, 1
        %v720 = vsel %vm473, %v718, %v719
        %v721 = vrot.slane %v551, 1
        %v722 = vrot.slane %v591, 1
        %v723 = vsel %vm473, %v721, %v722
        %v724 = vrot.slane %v552, 1
        %v725 = vrot.slane %v592, 1
        %v726 = vsel %vm473, %v724, %v725
        %v727 = vrot.slane %v553, 1
        %v728 = vrot.slane %v593, 1
        %v729 = vsel %vm473, %v727, %v728
        %730 = vrot.lane.b32.xlu0 %v708, 20
        %v731 = vpop.permute.xlu0 %730
        %732 = vrot.lane.b32.xlu0 %v711, 20
        %v733 = vpop.permute.xlu0 %732
        %734 = vrot.lane.b32.xlu0 %v714, 20
        %v735 = vpop.permute.xlu0 %734
        %736 = vrot.lane.b32.xlu0 %v717, 20
        %v737 = vpop.permute.xlu0 %736
        %738 = vrot.lane.b32.xlu0 %v720, 20
        %v739 = vpop.permute.xlu0 %738
        %740 = vrot.lane.b32.xlu0 %v723, 20
        %v741 = vpop.permute.xlu0 %740
        %742 = vrot.lane.b32.xlu0 %v726, 20
        %v743 = vpop.permute.xlu0 %742
        %744 = vrot.lane.b32.xlu0 %v729, 20
        %v745 = vpop.permute.xlu0 %744
        %v762 = vunpack.c.l.b16 %v272
        %v763 = vunpack.c.l.b16 %v273
        %v764 = vunpack.c.l.b16 %v275
        %v765 = vunpack.c.l.b16 %v276
        %v766 = vunpack.c.l.b16 %v278
        %v767 = vunpack.c.l.b16 %v279
        %v768 = vunpack.c.l.b16 %v281
        %v769 = vunpack.c.l.b16 %v282
        %v770 = vunpack.c.l.b16 %v284
        %v771 = vunpack.c.l.b16 %v285
        %v772 = vunpack.c.l.b16 %v287
        %v773 = vunpack.c.l.b16 %v288
        %v774 = vunpack.c.l.b16 %v290
        %v775 = vunpack.c.l.b16 %v291
        %v776 = vunpack.c.l.b16 %v293
        %v777 = vunpack.c.l.b16 %v294
        %v778 = vpack.c.b16 %v763, %v762
        %v779 = vpack.c.b16 %v765, %v764
        %v780 = vpack.c.b16 %v767, %v766
        %v781 = vpack.c.b16 %v769, %v768
        %v782 = vpack.c.b16 %v771, %v770
        %v783 = vpack.c.b16 %v773, %v772
        %v784 = vpack.c.b16 %v775, %v774
        %v785 = vpack.c.b16 %v777, %v776
        %786 = vrot.lane.b32.xlu0 %v778, 24
        %v787 = vpop.permute.xlu0 %786
        %788 = vrot.lane.b32.xlu0 %v779, 24
        %v789 = vpop.permute.xlu0 %788
        %790 = vrot.lane.b32.xlu0 %v780, 24
        %v791 = vpop.permute.xlu0 %790
        %792 = vrot.lane.b32.xlu0 %v781, 24
        %v793 = vpop.permute.xlu0 %792
        %794 = vrot.lane.b32.xlu0 %v782, 24
        %v795 = vpop.permute.xlu0 %794
        %796 = vrot.lane.b32.xlu0 %v783, 24
        %v797 = vpop.permute.xlu0 %796
        %798 = vrot.lane.b32.xlu0 %v784, 24
        %v799 = vpop.permute.xlu0 %798
        %800 = vrot.lane.b32.xlu0 %v785, 24
        %v801 = vpop.permute.xlu0 %800
        %v810 = vunpack.c.l.b16 %v274
        %v811 = vunpack.c.l.b16 %v277
        %v812 = vunpack.c.l.b16 %v280
        %v813 = vunpack.c.l.b16 %v283
        %v814 = vunpack.c.l.b16 %v286
        %v815 = vunpack.c.l.b16 %v289
        %v816 = vunpack.c.l.b16 %v292
        %v817 = vunpack.c.l.b16 %v295
        %v818 = vpack.c.b16 %v810, %v810
        %v819 = vpack.c.b16 %v811, %v811
        %v820 = vpack.c.b16 %v812, %v812
        %v821 = vpack.c.b16 %v813, %v813
        %v822 = vpack.c.b16 %v814, %v814
        %v823 = vpack.c.b16 %v815, %v815
        %v824 = vpack.c.b16 %v816, %v816
        %v825 = vpack.c.b16 %v817, %v817
        %v827 = vshrl.u32 %v778, 16
        %v829 = vshll.u32 %v778, 16
        %v831 = vrot.slane %v829, 1
        %v832 = vor.u32 %v827, %v831
        %v834 = vshll.u32 %v818, 16
        %v836 = vrot.slane %v834, 1
        %v837 = vsel %vm360, %v832, %v836
        %v839 = vshrl.u32 %v779, 16
        %v841 = vshll.u32 %v779, 16
        %v843 = vrot.slane %v841, 1
        %v844 = vor.u32 %v839, %v843
        %v846 = vshll.u32 %v819, 16
        %v848 = vrot.slane %v846, 1
        %v849 = vsel %vm360, %v844, %v848
        %v851 = vshrl.u32 %v780, 16
        %v853 = vshll.u32 %v780, 16
        %v855 = vrot.slane %v853, 1
        %v856 = vor.u32 %v851, %v855
        %v858 = vshll.u32 %v820, 16
        %v860 = vrot.slane %v858, 1
        %v861 = vsel %vm360, %v856, %v860
        %v863 = vshrl.u32 %v781, 16
        %v865 = vshll.u32 %v781, 16
        %v867 = vrot.slane %v865, 1
        %v868 = vor.u32 %v863, %v867
        %v870 = vshll.u32 %v821, 16
        %v872 = vrot.slane %v870, 1
        %v873 = vsel %vm360, %v868, %v872
        %v875 = vshrl.u32 %v782, 16
        %v877 = vshll.u32 %v782, 16
        %v879 = vrot.slane %v877, 1
        %v880 = vor.u32 %v875, %v879
        %v882 = vshll.u32 %v822, 16
        %v884 = vrot.slane %v882, 1
        %v885 = vsel %vm360, %v880, %v884
        %v887 = vshrl.u32 %v783, 16
        %v889 = vshll.u32 %v783, 16
        %v891 = vrot.slane %v889, 1
        %v892 = vor.u32 %v887, %v891
        %v894 = vshll.u32 %v823, 16
        %v896 = vrot.slane %v894, 1
        %v897 = vsel %vm360, %v892, %v896
        %v899 = vshrl.u32 %v784, 16
        %v901 = vshll.u32 %v784, 16
        %v903 = vrot.slane %v901, 1
        %v904 = vor.u32 %v899, %v903
        %v906 = vshll.u32 %v824, 16
        %v908 = vrot.slane %v906, 1
        %v909 = vsel %vm360, %v904, %v908
        %v911 = vshrl.u32 %v785, 16
        %v913 = vshll.u32 %v785, 16
        %v915 = vrot.slane %v913, 1
        %v916 = vor.u32 %v911, %v915
        %v918 = vshll.u32 %v825, 16
        %v920 = vrot.slane %v918, 1
        %v921 = vsel %vm360, %v916, %v920
        %922 = vrot.lane.b32.xlu0 %v837, 28
        %v923 = vpop.permute.xlu0 %922
        %924 = vrot.lane.b32.xlu0 %v849, 28
        %v925 = vpop.permute.xlu0 %924
        %926 = vrot.lane.b32.xlu0 %v861, 28
        %v927 = vpop.permute.xlu0 %926
        %928 = vrot.lane.b32.xlu0 %v873, 28
        %v929 = vpop.permute.xlu0 %928
        %930 = vrot.lane.b32.xlu0 %v885, 28
        %v931 = vpop.permute.xlu0 %930
        %932 = vrot.lane.b32.xlu0 %v897, 28
        %v933 = vpop.permute.xlu0 %932
        %934 = vrot.lane.b32.xlu0 %v909, 28
        %v935 = vpop.permute.xlu0 %934
        %936 = vrot.lane.b32.xlu0 %v921, 28
        %v937 = vpop.permute.xlu0 %936
        %v938 = vrot.slane %v778, 1
        %v939 = vrot.slane %v818, 1
        %v940 = vsel %vm473, %v938, %v939
        %v941 = vrot.slane %v779, 1
        %v942 = vrot.slane %v819, 1
        %v943 = vsel %vm473, %v941, %v942
        %v944 = vrot.slane %v780, 1
        %v945 = vrot.slane %v820, 1
        %v946 = vsel %vm473, %v944, %v945
        %v947 = vrot.slane %v781, 1
        %v948 = vrot.slane %v821, 1
        %v949 = vsel %vm473, %v947, %v948
        %v950 = vrot.slane %v782, 1
        %v951 = vrot.slane %v822, 1
        %v952 = vsel %vm473, %v950, %v951
        %v953 = vrot.slane %v783, 1
        %v954 = vrot.slane %v823, 1
        %v955 = vsel %vm473, %v953, %v954
        %v956 = vrot.slane %v784, 1
        %v957 = vrot.slane %v824, 1
        %v958 = vsel %vm473, %v956, %v957
        %v959 = vrot.slane %v785, 1
        %v960 = vrot.slane %v825, 1
        %v961 = vsel %vm473, %v959, %v960
        %962 = vrot.lane.b32.xlu0 %v940, 32
        %v963 = vpop.permute.xlu0 %962
        %964 = vrot.lane.b32.xlu0 %v943, 32
        %v965 = vpop.permute.xlu0 %964
        %966 = vrot.lane.b32.xlu0 %v946, 32
        %v967 = vpop.permute.xlu0 %966
        %968 = vrot.lane.b32.xlu0 %v949, 32
        %v969 = vpop.permute.xlu0 %968
        %970 = vrot.lane.b32.xlu0 %v952, 32
        %v971 = vpop.permute.xlu0 %970
        %972 = vrot.lane.b32.xlu0 %v955, 32
        %v973 = vpop.permute.xlu0 %972
        %974 = vrot.lane.b32.xlu0 %v958, 32
        %v975 = vpop.permute.xlu0 %974
        %976 = vrot.lane.b32.xlu0 %v961, 32
        %v977 = vpop.permute.xlu0 %976
        %vm978 = vcmask 31744
        %v980 = vsel %vm978, %v328, %v458
        %v982 = vsel %vm978, %v329, %v460
        %v984 = vsel %vm978, %v330, %v462
        %v986 = vsel %vm978, %v331, %v464
        %v988 = vsel %vm978, %v332, %v466
        %v990 = vsel %vm978, %v333, %v468
        %v992 = vsel %vm978, %v334, %v470
        %v994 = vsel %vm978, %v335, %v472
        %vm995 = vcmask 64512
        %v997 = vsel %vm995, %v980, %v499
        %v999 = vsel %vm995, %v982, %v501
        %v1001 = vsel %vm995, %v984, %v503
        %v1003 = vsel %vm995, %v986, %v505
        %v1005 = vsel %vm995, %v988, %v507
        %v1007 = vsel %vm995, %v990, %v509
        %v1009 = vsel %vm995, %v992, %v511
        %v1011 = vsel %vm995, %v994, %v513
        %vm1012 = vcmask 97280
        %v1014 = vsel %vm1012, %v997, %v555
        %v1016 = vsel %vm1012, %v999, %v557
        %v1018 = vsel %vm1012, %v1001, %v559
        %v1020 = vsel %vm1012, %v1003, %v561
        %v1022 = vsel %vm1012, %v1005, %v563
        %v1024 = vsel %vm1012, %v1007, %v565
        %v1026 = vsel %vm1012, %v1009, %v567
        %v1028 = vsel %vm1012, %v1011, %v569
        %vm1029 = vcmask 130048
        %v1031 = vsel %vm1029, %v1014, %v691
        %v1033 = vsel %vm1029, %v1016, %v693
        %v1035 = vsel %vm1029, %v1018, %v695
        %v1037 = vsel %vm1029, %v1020, %v697
        %v1039 = vsel %vm1029, %v1022, %v699
        %v1041 = vsel %vm1029, %v1024, %v701
        %v1043 = vsel %vm1029, %v1026, %v703
        %v1045 = vsel %vm1029, %v1028, %v705
        %vm1046 = vcmask 162816
        %v1048 = vsel %vm1046, %v1031, %v731
        %v1050 = vsel %vm1046, %v1033, %v733
        %v1052 = vsel %vm1046, %v1035, %v735
        %v1054 = vsel %vm1046, %v1037, %v737
        %v1056 = vsel %vm1046, %v1039, %v739
        %v1058 = vsel %vm1046, %v1041, %v741
        %v1060 = vsel %vm1046, %v1043, %v743
        %v1062 = vsel %vm1046, %v1045, %v745
        %vm1063 = vcmask 195584
        %v1065 = vsel %vm1063, %v1048, %v787
        %v1067 = vsel %vm1063, %v1050, %v789
        %v1069 = vsel %vm1063, %v1052, %v791
        %v1071 = vsel %vm1063, %v1054, %v793
        %v1073 = vsel %vm1063, %v1056, %v795
        %v1075 = vsel %vm1063, %v1058, %v797
        %v1077 = vsel %vm1063, %v1060, %v799
        %v1079 = vsel %vm1063, %v1062, %v801
        %vm1080 = vcmask 228352
        %v1082 = vsel %vm1080, %v1065, %v923
        %v1084 = vsel %vm1080, %v1067, %v925
        %v1086 = vsel %vm1080, %v1069, %v927
        %v1088 = vsel %vm1080, %v1071, %v929
        %v1090 = vsel %vm1080, %v1073, %v931
        %v1092 = vsel %vm1080, %v1075, %v933
        %v1094 = vsel %vm1080, %v1077, %v935
        %v1096 = vsel %vm1080, %v1079, %v937
        %vm1097 = vcmask 261120
        %v1099 = vsel %vm1097, %v1082, %v963
        %v1101 = vsel %vm1097, %v1084, %v965
        %v1103 = vsel %vm1097, %v1086, %v967
        %v1105 = vsel %vm1097, %v1088, %v969
        %v1107 = vsel %vm1097, %v1090, %v971
        %v1109 = vsel %vm1097, %v1092, %v973
        %v1111 = vsel %vm1097, %v1094, %v975
        %v1113 = vsel %vm1097, %v1096, %v977
        %v1114 = vld [vmem:[%s1] sm:$0xf]
        %v1115 = vld [vmem:[%s1 + $0x4] sm:$0xf]
        %v1116 = vld [vmem:[%s1 + $0x8] sm:$0xf]
        %v1117 = vld [vmem:[%s1 + $0xc] sm:$0xf]
        %v1118 = vld [vmem:[%s1 + $0x10] sm:$0x3]
        %v1124 = vunpack.c.l.b16 %v1114
        %v1125 = vunpack.c.l.b16 %v1115
        %v1126 = vunpack.c.l.b16 %v1116
        %v1127 = vunpack.c.l.b16 %v1117
        %v1128 = vunpack.c.l.b16 %v1118
        %v1129 = vpack.c.b16 %v1125, %v1124
        %v1130 = vpack.c.b16 %v1127, %v1126
        %v1131 = vpack.c.b16 %v1128, %v1128
        %vm1134 = vcmask 293888
        %v1135 = vsel %vm1134, %v1099, 0
        %v1137 = vsel %vm1134, %v1101, 0
        %v1139 = vsel %vm1134, %v1103, 0
        %v1141 = vsel %vm1134, %v1105, 0
        %v1143 = vsel %vm1134, %v1107, 0
        %v1145 = vsel %vm1134, %v1109, 0
        %v1147 = vsel %vm1134, %v1111, 0
        %v1149 = vsel %vm1134, %v1113, 0
        %vm1151 = vcmask 1041408
        %v1153 = vsel %vm1151, %v1131, 0
        %1155 = vmatprep.subr.bf16.mxu0 0
        %1156 = vmatpush1.bf16.msra.mxu0 0
        %1157 = vmatprep.subr.bf16.mxu0 0
        %1158 = vmatpush1.bf16.msra.mxu0 0
        %1159 = vmatprep.subr.bf16.mxu0 0
        %1160 = vmatpush1.bf16.msra.mxu0 0
        %1161 = vmatprep.subr.bf16.mxu0 0
        %1162 = vmatpush1.bf16.msra.mxu0 0
        %1163 = vmatprep.subr.bf16.mxu0 0
        %1164 = vmatpush1.bf16.msra.mxu0 0
        %1165 = vmatprep.subr.bf16.mxu0 0
        %1166 = vmatpush1.bf16.msra.mxu0 %v1153
        %1167 = vmatprep.subr.bf16.mxu0 0
        %1168 = vmatpush1.bf16.msra.mxu0 %v1130
        %1169 = vmatprep.subr.bf16.mxu0 0
        %1170 = vmatpush1.bf16.msra.mxu0 %v1129
        %1171 = vmatprep.subr.bf16.mxu0 0
        %1172 = vmatpush2.bf16.msra.mxu0 0
        %1173 = vmatprep.subr.bf16.mxu0 0
        %1174 = vmatpush2.bf16.msra.mxu0 0
        %1175 = vmatprep.subr.bf16.mxu0 0
        %1176 = vmatpush2.bf16.msra.mxu0 0
        %1177 = vmatprep.subr.bf16.mxu0 0
        %1178 = vmatpush2.bf16.msra.mxu0 0
        %1179 = vmatprep.subr.bf16.mxu0 0
        %1180 = vmatpush2.bf16.msra.mxu0 0
        %1181 = vmatprep.subr.bf16.mxu0 0
        %1182 = vmatpush2.bf16.msra.mxu0 0
        %1183 = vmatprep.subr.bf16.mxu0 0
        %1184 = vmatpush2.bf16.msra.mxu0 0
        %1185 = vmatprep.subr.bf16.mxu0 0
        %1186 = vmatpush2.bf16.msra.mxu0 0
        %1187 = vmatprep.mubr.bf16.mxu0 0
        %1188 = vmatmul.mubr.bf16.gmra.mxu0 %v1135
        %v1189 = vpop.f32.mrf.mxu0
        %v1190 = vadd.f32 0.0, %v1189
        %v1191 = vpop.f32.mrf.mxu0
        %v1192 = vpop.f32.mrf.mxu0
        %v1193 = vadd.f32 0.0, %v1192
        %v1194 = vpop.f32.mrf.mxu0
        %1195 = vmatprep.mubr.bf16.mxu0 0
        %1196 = vmatmul.mubr.bf16.gmra.mxu0 %v1137
        %v1197 = vpop.f32.mrf.mxu0
        %v1198 = vadd.f32 0.0, %v1197
        %v1199 = vpop.f32.mrf.mxu0
        %v1200 = vpop.f32.mrf.mxu0
        %v1201 = vadd.f32 0.0, %v1200
        %v1202 = vpop.f32.mrf.mxu0
        %1203 = vmatprep.mubr.bf16.mxu0 0
        %1204 = vmatmul.mubr.bf16.gmra.mxu0 %v1139
        %v1205 = vpop.f32.mrf.mxu0
        %v1206 = vadd.f32 0.0, %v1205
        %v1207 = vpop.f32.mrf.mxu0
        %v1208 = vpop.f32.mrf.mxu0
        %v1209 = vadd.f32 0.0, %v1208
        %v1210 = vpop.f32.mrf.mxu0
        %1211 = vmatprep.mubr.bf16.mxu0 0
        %1212 = vmatmul.mubr.bf16.gmra.mxu0 %v1141
        %v1213 = vpop.f32.mrf.mxu0
        %v1214 = vadd.f32 0.0, %v1213
        %v1215 = vpop.f32.mrf.mxu0
        %v1216 = vpop.f32.mrf.mxu0
        %v1217 = vadd.f32 0.0, %v1216
        %v1218 = vpop.f32.mrf.mxu0
        %1219 = vmatprep.mubr.bf16.mxu0 0
        %1220 = vmatmul.mubr.bf16.gmra.mxu0 %v1143
        %v1221 = vpop.f32.mrf.mxu0
        %v1222 = vadd.f32 0.0, %v1221
        %v1223 = vpop.f32.mrf.mxu0
        %v1224 = vpop.f32.mrf.mxu0
        %v1225 = vadd.f32 0.0, %v1224
        %v1226 = vpop.f32.mrf.mxu0
        %1227 = vmatprep.mubr.bf16.mxu0 0
        %1228 = vmatmul.mubr.bf16.gmra.mxu0 %v1145
        %v1229 = vpop.f32.mrf.mxu0
        %v1230 = vadd.f32 0.0, %v1229
        %v1231 = vpop.f32.mrf.mxu0
        %v1232 = vpop.f32.mrf.mxu0
        %v1233 = vadd.f32 0.0, %v1232
        %v1234 = vpop.f32.mrf.mxu0
        %1235 = vmatprep.mubr.bf16.mxu0 0
        %1236 = vmatmul.mubr.bf16.gmra.mxu0 %v1147
        %v1237 = vpop.f32.mrf.mxu0
        %v1238 = vadd.f32 0.0, %v1237
        %v1239 = vpop.f32.mrf.mxu0
        %v1240 = vpop.f32.mrf.mxu0
        %v1241 = vadd.f32 0.0, %v1240
        %v1242 = vpop.f32.mrf.mxu0
        %1243 = vmatprep.mubr.bf16.mxu0 0
        %1244 = vmatmul.mubr.bf16.gmra.mxu0 %v1149
        %v1245 = vpop.f32.mrf.mxu0
        %v1246 = vadd.f32 0.0, %v1245
        %v1247 = vpop.f32.mrf.mxu0
        %v1248 = vpop.f32.mrf.mxu0
        %v1249 = vadd.f32 0.0, %v1248
        %v1250 = vpop.f32.mrf.mxu0
        %1251 = vdwg.mxu0
        %v1252 = vld [vmem:[%s2] sm:$0x1]
        %v1254 = vlaneseq
        %v1255 = vshrl.u32 %v1254, 7
        %v1256 = vsub.s32 0, %v1255
        %v1257 = vrot.slane %v1252, %v1256
        %v1259 = vmul.f32 %v1190, %v1257
        %v1260 = vmul.f32 %v1193, %v1257
        %v1261 = vmul.f32 %v1198, %v1257
        %v1262 = vmul.f32 %v1201, %v1257
        %v1263 = vmul.f32 %v1206, %v1257
        %v1264 = vmul.f32 %v1209, %v1257
        %v1265 = vmul.f32 %v1214, %v1257
        %v1266 = vmul.f32 %v1217, %v1257
        %v1267 = vmul.f32 %v1222, %v1257
        %v1268 = vmul.f32 %v1225, %v1257
        %v1269 = vmul.f32 %v1230, %v1257
        %v1270 = vmul.f32 %v1233, %v1257
        %v1271 = vmul.f32 %v1238, %v1257
        %v1272 = vmul.f32 %v1241, %v1257
        %v1273 = vmul.f32 %v1246, %v1257
        %v1274 = vmul.f32 %v1249, %v1257
        %v1275 = vld [vmem:[%s3] sm:$0x1]
        %v1277 = vlaneseq
        %v1278 = vshrl.u32 %v1277, 7
        %v1279 = vsub.s32 0, %v1278
        %v1280 = vrot.slane %v1275, %v1279
        %v1282 = vadd.f32 %v1259, %v1280
        %v1283 = vadd.f32 %v1260, %v1280
        %v1284 = vadd.f32 %v1261, %v1280
        %v1285 = vadd.f32 %v1262, %v1280
        %v1286 = vadd.f32 %v1263, %v1280
        %v1287 = vadd.f32 %v1264, %v1280
        %v1288 = vadd.f32 %v1265, %v1280
        %v1289 = vadd.f32 %v1266, %v1280
        %v1290 = vadd.f32 %v1267, %v1280
        %v1291 = vadd.f32 %v1268, %v1280
        %v1292 = vadd.f32 %v1269, %v1280
        %v1293 = vadd.f32 %v1270, %v1280
        %v1294 = vadd.f32 %v1271, %v1280
        %v1295 = vadd.f32 %v1272, %v1280
        %v1296 = vadd.f32 %v1273, %v1280
        %v1297 = vadd.f32 %v1274, %v1280
        %v1298 = vmax.f32 %v1282, 0.0
        %v1299 = vmax.f32 %v1283, 0.0
        %v1300 = vmax.f32 %v1284, 0.0
        %v1301 = vmax.f32 %v1285, 0.0
        %v1302 = vmax.f32 %v1286, 0.0
        %v1303 = vmax.f32 %v1287, 0.0
        %v1304 = vmax.f32 %v1288, 0.0
        %v1305 = vmax.f32 %v1289, 0.0
        %v1306 = vmax.f32 %v1290, 0.0
        %v1307 = vmax.f32 %v1291, 0.0
        %v1308 = vmax.f32 %v1292, 0.0
        %v1309 = vmax.f32 %v1293, 0.0
        %v1310 = vmax.f32 %v1294, 0.0
        %v1311 = vmax.f32 %v1295, 0.0
        %v1312 = vmax.f32 %v1296, 0.0
        %v1313 = vmax.f32 %v1297, 0.0
        %1314 = vst.msk [vmem:[%s204] sm:$0xff] %vm1097, %v1298
        %1315 = vst.msk [vmem:[%s204 + $0x8] sm:$0xff] %vm1097, %v1299
        %1316 = vst.msk [vmem:[%s204 + $0x10] sm:$0xff] %vm1097, %v1300
        %1317 = vst.msk [vmem:[%s204 + $0x18] sm:$0xff] %vm1097, %v1301
        %1318 = vst.msk [vmem:[%s204 + $0x20] sm:$0xff] %vm1097, %v1302
        %1319 = vst.msk [vmem:[%s204 + $0x28] sm:$0xff] %vm1097, %v1303
        %1320 = vst.msk [vmem:[%s204 + $0x30] sm:$0xff] %vm1097, %v1304
        %1321 = vst.msk [vmem:[%s204 + $0x38] sm:$0xff] %vm1097, %v1305
        %1322 = vst.msk [vmem:[%s204 + $0x40] sm:$0xff] %vm1097, %v1306
        %1323 = vst.msk [vmem:[%s204 + $0x48] sm:$0xff] %vm1097, %v1307
        %1324 = vst.msk [vmem:[%s204 + $0x50] sm:$0xff] %vm1097, %v1308
        %1325 = vst.msk [vmem:[%s204 + $0x58] sm:$0xff] %vm1097, %v1309
        %1326 = vst.msk [vmem:[%s204 + $0x60] sm:$0xff] %vm1097, %v1310
        %1327 = vst.msk [vmem:[%s204 + $0x68] sm:$0xff] %vm1097, %v1311
        %1328 = vst.msk [vmem:[%s204 + $0x70] sm:$0xff] %vm1097, %v1312
        %1329 = vst.msk [vmem:[%s204 + $0x78] sm:$0xff] %vm1097, %v1313
        %s1330 = sand.u32 %s129, 1
        %s1331 = scalar_lea.sflag [#allocation3], %s1330
        %s1332 = sand.u32 %s129, 1
        %s1333 = smul.addr %s1332, 128
        %s1334 = scalar_lea.vmem [#allocation2], %s1333
        // Predicated region
        $region37: #{basic_conv2d.1} parent=35 // pred_check
          %p1335 = pneg %p139
        $region38: #{basic_conv2d.1} parent=35 // pred_check_branch
          %1337 = sbr.rel (%p1335) target = $region40
        $region39: #{basic_conv2d.1} parent=35 // pred_region
          %s1338 = smul.u32 16, %s23
          %s1340 = ssub.s32 2048, 2048
          %1341 = vsyncadd %s1331, %s1340
          %s1342 = smul.addr %s22, 32
          %s1343 = sadd.s32 %s1338, %s1342
          %s1344 = smul.addr %s1343, 128
          %s1345 = scalar_lea.hbm %s4, %s1344
          %s1346 = sshll.u32 %s1334, 4
          %s1347 = int_to_ptr.vmem [resolvable:$true] %s1346
          %1352 = dma.vmem_to_hbm [thread:$0]  %s1347, 2048, %s1345, %s1331, 128, 128, 8
        $region40: #{basic_conv2d.1} parent=35 // pred_fallthru
          _
      $region36: #{basic_conv2d.1} parent=5 // pred_fallthru
        _
      %p1353 = scmp.le.s32.totalorder 2, %s13
      // Predicated region
      $region41: #{basic_conv2d.1} parent=5 // pred_check
        %p1354 = pneg %p1353
      $region42: #{basic_conv2d.1} parent=5 // pred_check_branch
        %1356 = sbr.rel (%p1354) target = $region44
      $region43: #{basic_conv2d.1} parent=5 // pred_region
        %s1357 = ssub.s32 %s13, 2
        // Predicated region
        $region45: #{basic_conv2d.1} parent=43 // pred_check
          %p1358 = pneg %p145
        $region46: #{basic_conv2d.1} parent=43 // pred_check_branch
          %1360 = sbr.rel (%p1358) target = $region48
        $region47: #{basic_conv2d.1} parent=43 // pred_region
          %s1361 = sand.u32 %s130, 1
          %s1362 = scalar_lea.sflag [#allocation3], %s1361
          %s1363 = sand.u32 %s130, 1
          %s1364 = smul.addr %s1363, 128
          %s1365 = scalar_lea.vmem [#allocation2], %s1364
          %1366 = dma.done %s1362, 2048
        $region48: #{basic_conv2d.1} parent=43 // pred_fallthru
          _
      $region44: #{basic_conv2d.1} parent=5 // pred_fallthru
        _
    $region6: #{basic_conv2d.1} parent=1 // loop_footer
      %s17 = sadd.s32 1, %s13
    $region7: #{basic_conv2d.1} parent=1 // loop_footer_branch
      %12 = sbr.rel target = $region3
    $region8: #{basic_conv2d.1} parent=1 // loop_exit
      _
    %1367 = vsyncpa [#allocation3], 1
    %s1368 = scalar_lea.sflag [#allocation3], 1
    %1369 = vsyncpa %s1368, 1

</llo_original>
